<compile_context>
chip_gen: v7x
topology: tpu7x:2x2x1
jax: 0.10.0
libtpu: 0.0.40
codegen_flags: <defaults>
</compile_context>

<pallas_src>
import functools

import jax
import jax.numpy as jnp
from jax import lax
from jax.experimental import pallas as pl
from jax.experimental.pallas import tpu as pltpu


def _gaussian_compute_dtype():
    """bf16 exp/elementwise chain on v6e/v7x (bf16 VPU/EUP); f32 on v5e/older."""
    try:
        kind = jax.devices()[0].device_kind.lower()
    except Exception:
        return jnp.float32
    if "v6" in kind or "v7" in kind:
        return jnp.bfloat16
    return jnp.float32


# --------------------------------------------------------------------------
# Kernel 1: SampledSelfAttention hot path (single invocation, all in VMEM)
# --------------------------------------------------------------------------
def _sampled_attention_kernel(sf_ref, wqkv_ref, bqkv_ref, out_ref):
    sf = sf_ref[...]                                                   # (S, D)
    d = sf.shape[1]
    # Fused Q/K/V projection: one (S, D) @ (D, 3D) matmul.
    qkv = (jnp.dot(sf, wqkv_ref[...], preferred_element_type=jnp.float32)
           + bqkv_ref[...])                                            # (S, 3D)
    q = qkv[:, :d]
    k = qkv[:, d:2 * d]
    v = qkv[:, 2 * d:]
    # q @ k^T expressed as a direct contraction (no XLU transpose of k).
    scores = lax.dot_general(q, k, (((1,), (1,)), ((), ())),
                             preferred_element_type=jnp.float32)       # (S, S)
    # NOTE: mirrors the PyTorch reference exactly (unguarded divide by the
    # global max of the raw scores).
    gmax = jnp.max(scores)
    scaled = scores * (1.0 / gmax)          # scalar reciprocal, then broadcast
    m = jnp.max(scaled, axis=-1, keepdims=True)
    e = jnp.exp(scaled - m)
    denom = jnp.sum(e, axis=-1, keepdims=True)                         # (S, 1)
    attn = e * pl.reciprocal(denom, approx=True)
    # mean(attn @ v, axis=0) == mean(attn, axis=0) @ v  (linearity).
    p = jnp.mean(attn, axis=0, keepdims=True)                          # (1, S)
    out_ref[...] = jnp.dot(p, v, preferred_element_type=jnp.float32)   # (1, D)


# --------------------------------------------------------------------------
# Kernel 2: BlockSelfAttention (row-tiled) fused with the weighted combine
# --------------------------------------------------------------------------
def _gauss_combine_kernel(w_ref, samp_ref, rows_ref, block_ref, out_ref, *,
                          neg_inv_two_sigma, inv_block, compute_dtype):
    rows = rows_ref[...]                                               # (TR, D)
    blk = block_ref[...]                                               # (B, D)
    sq_r = jnp.sum(rows * rows, axis=-1, keepdims=True)                # (TR, 1)
    sq_b = jnp.sum(blk * blk, axis=-1, keepdims=True)                  # (B, 1)
    # ||r_i - b_j||^2 via the gram trick; contraction expressed directly so
    # Mosaic feeds the MXU without materializing blk^T.
    gram = lax.dot_general(rows, blk, (((1,), (1,)), ((), ())),
                           preferred_element_type=jnp.float32)         # (TR, B)
    dist = jnp.maximum(sq_r + sq_b.T - 2.0 * gram, 0.0)
    # exp chain in bf16 on v6e/v7x, f32 on v5e.
    w = jnp.exp(dist.astype(compute_dtype) * neg_inv_two_sigma)        # (TR, B)
    gauss = jnp.dot(w, blk.astype(compute_dtype),
                    preferred_element_type=jnp.float32)                # (TR, D)
    # Fused combine epilogue: w0 * sampled_row + (w1 / block_size) * gauss.
    out_ref[...] = w_ref[0] * samp_ref[...] + (w_ref[1] * inv_block) * gauss


# --------------------------------------------------------------------------
# Wrapper (glue: gather / sampling / tiny 2-element softmax stay in plain JAX)
# --------------------------------------------------------------------------
def multi_attention_fusion(features, params, key, *, num_samples=1024,
                           block_size=1024):
    N, D = features.shape
    features = features.astype(jnp.float32)
    k_idx, k_noise = jax.random.split(key)

    # ---- SampledSelfAttention --------------------------------------------
    # TODO(synk): the random row gather stays in XLA; a scalar-prefetch +
    # pl.Element index_map gather could stream rows straight into VMEM.
    idx = jax.random.randint(k_idx, (num_samples,), 0, N)
    sampled = features[idx]                                            # (S, D)

    samp_row = pl.pallas_call(
        _sampled_attention_kernel,
        out_shape=jax.ShapeDtypeStruct((1, D), jnp.float32),
        compiler_params=pltpu.CompilerParams(
            vmem_limit_bytes=48 * 1024 * 1024),   # safe on v5e/v6e/v7x
    )(sampled, params["wqkv_t"], params["bqkv"])

    # ---- fusion weights (2-element softmax with noise; tiny glue) ---------
    aw = params["attention_weights"].astype(jnp.float32)
    noise = jax.random.normal(k_noise, (2,), jnp.float32) * 1e-6
    nw = jax.nn.softmax((aw - jnp.max(aw)) / 10.0 + noise, axis=0)     # (2,)

    # ---- BlockSelfAttention fused with the weighted combine ---------------
    num_blocks = N // block_size
    covered = num_blocks * block_size

    main = None
    if num_blocks > 0:
        TR = 256 if block_size % 256 == 0 else block_size              # row tile
        row_tiles = block_size // TR
        compute_dtype = _gaussian_compute_dtype()
        xg = features[:covered]

        main = pl.pallas_call(
            functools.partial(
                _gauss_combine_kernel,
                neg_inv_two_sigma=-1.0 / (2.0 * (D / 10.0)),
                inv_block=1.0 / float(block_size),
                compute_dtype=compute_dtype),
            out_shape=jax.ShapeDtypeStruct((covered, D), jnp.float32),
            grid=(num_blocks, row_tiles),
            in_specs=[
                pl.BlockSpec(memory_space=pltpu.MemorySpace.SMEM),     # nw (2,)
                pl.BlockSpec((1, D), lambda i, r: (0, 0)),             # samp row
                pl.BlockSpec((TR, D),
                             lambda i, r: (i * row_tiles + r, 0)),     # row tile
                pl.BlockSpec((block_size, D), lambda i, r: (i, 0)),    # block
            ],
            out_specs=pl.BlockSpec((TR, D),
                                   lambda i, r: (i * row_tiles + r, 0)),
            compiler_params=pltpu.CompilerParams(
                dimension_semantics=("parallel", "parallel")),
        )(nw, samp_row, xg, xg)

    # Tail rows (N % block_size) have zero Gaussian output in the reference,
    # so their combined value is just w0 * sampled_row (handled wrapper-side).
    tail_n = N - covered
    if main is None:
        return jnp.broadcast_to(nw[0] * samp_row, (N, D))
    if tail_n > 0:
        tail = jnp.broadcast_to(nw[0] * samp_row, (tail_n, D))
        return jnp.concatenate([main, tail], axis=0)
    return main


def init_params(key, feature_dim):
    """torch.nn.Linear-style init; Q/K/V packed into one (D, 3D) weight."""
    ks = jax.random.split(key, 6)
    bound = 1.0 / jnp.sqrt(float(feature_dim))

    def lin(kw, kb):
        w = jax.random.uniform(kw, (feature_dim, feature_dim), jnp.float32,
                               minval=-bound, maxval=bound)
        b = jax.random.uniform(kb, (feature_dim,), jnp.float32,
                               minval=-bound, maxval=bound)
        # store W^T so the kernel computes x @ W^T + b like torch.nn.Linear
        return w.T, b

    wq_t, bq = lin(ks[0], ks[1])
    wk_t, bk = lin(ks[2], ks[3])
    wv_t, bv = lin(ks[4], ks[5])
    wqkv_t = jnp.concatenate([wq_t, wk_t, wv_t], axis=1)          # (D, 3D)
    bqkv = jnp.concatenate([bq, bk, bv]).reshape(1, 3 * feature_dim)
    return dict(
        wqkv_t=wqkv_t, bqkv=bqkv,
        attention_weights=jnp.array([1.0, 1.0], jnp.float32),
    )


if __name__ == "__main__":
    key = jax.random.PRNGKey(0)
    k_feat, k_param, k_fwd = jax.random.split(key, 3)

    # block_size is hardcoded to 1024 in MultiAttentionFusion, so use N = 2048
    # so the Gaussian branch is non-trivial; feature_dim kept small (32).
    N, D = 2048, 32
    num_samples = 128

    features = jax.random.normal(k_feat, (N, D), jnp.float32)
    params = init_params(k_param, D)

    out = multi_attention_fusion(features, params, k_fwd,
                                 num_samples=num_samples, block_size=1024)
    jax.block_until_ready(out)
    assert out.shape == (N, D)
    print("KERNEL_OK")
</pallas_src>

<mosaic_0001>
module attributes {stable_mosaic.version = 11 : i64} {
  func.func @_sampled_attention_kernel(%arg0: memref<128x32xf32, #tpu.memory_space<vmem>>, %arg1: memref<32x96xf32, #tpu.memory_space<vmem>>, %arg2: memref<1x96xf32, #tpu.memory_space<vmem>>, %arg3: memref<1x32xf32, #tpu.memory_space<vmem>>) attributes {dimension_semantics = [], scalar_prefetch = 0 : i64, scratch_operands = 0 : i64, tpu.core_type = #tpu.core_type<tc>} {
    %c0 = arith.constant 0 : index
    %c0_0 = arith.constant 0 : index
    %0 = vector.load %arg0[%c0, %c0_0] : memref<128x32xf32, #tpu.memory_space<vmem>>, vector<128x32xf32>
    %c0_1 = arith.constant 0 : index
    %c0_2 = arith.constant 0 : index
    %1 = vector.load %arg1[%c0_1, %c0_2] : memref<32x96xf32, #tpu.memory_space<vmem>>, vector<32x96xf32>
    %cst = arith.constant dense<0.000000e+00> : vector<128x96xf32>
    %2 = tpu.matmul %0, %1, %cst {dimension_numbers = #tpu.dot_dimension_numbers<[1], [0], [0], [1], [0, 0, 1, 1], [], []>} : vector<128x32xf32>, vector<32x96xf32>, vector<128x96xf32> -> vector<128x96xf32>
    %c0_3 = arith.constant 0 : index
    %c0_4 = arith.constant 0 : index
    %3 = vector.load %arg2[%c0_3, %c0_4] : memref<1x96xf32, #tpu.memory_space<vmem>>, vector<1x96xf32>
    %4 = vector.broadcast %3 : vector<1x96xf32> to vector<128x96xf32>
    %5 = arith.addf %2, %4 : vector<128x96xf32>
    %6 = vector.extract_strided_slice %5 {offsets = [0, 0], sizes = [128, 32], strides = [1, 1]} : vector<128x96xf32> to vector<128x32xf32>
    %7 = vector.extract_strided_slice %5 {offsets = [0, 32], sizes = [128, 32], strides = [1, 1]} : vector<128x96xf32> to vector<128x32xf32>
    %8 = vector.extract_strided_slice %5 {offsets = [0, 64], sizes = [128, 32], strides = [1, 1]} : vector<128x96xf32> to vector<128x32xf32>
    %cst_5 = arith.constant dense<0.000000e+00> : vector<128x128xf32>
    %9 = tpu.matmul %6, %7, %cst_5 {dimension_numbers = #tpu.dot_dimension_numbers<[1], [1], [0], [0], [0, 0, 1, 0], [], []>} : vector<128x32xf32>, vector<128x32xf32>, vector<128x128xf32> -> vector<128x128xf32>
    %10 = vector.shape_cast %9 : vector<128x128xf32> to vector<1x128x128xf32>
    %cst_6 = arith.constant dense<0xFF800000> : vector<1xf32>
    %11 = vector.multi_reduction <maximumf>, %10, %cst_6 [1, 2] : vector<1x128x128xf32> to vector<1xf32>
    %12 = vector.shape_cast %11 : vector<1xf32> to vector<1x1x1xf32>
    %13 = vector.extract %12[0, 0, 0] : f32 from vector<1x1x1xf32>
    %cst_7 = arith.constant 1.000000e+00 : f32
    %14 = arith.divf %cst_7, %13 : f32
    %15 = vector.broadcast %14 : f32 to vector<128x128xf32>
    %16 = arith.mulf %9, %15 : vector<128x128xf32>
    %cst_8 = arith.constant dense<0xFF800000> : vector<128xf32>
    %17 = vector.multi_reduction <maximumf>, %16, %cst_8 [1] : vector<128x128xf32> to vector<128xf32>
    %18 = vector.shape_cast %17 : vector<128xf32> to vector<128x1xf32>
    %19 = vector.broadcast %18 : vector<128x1xf32> to vector<128x128xf32>
    %20 = arith.subf %16, %19 : vector<128x128xf32>
    %21 = math.exp %20 : vector<128x128xf32>
    %cst_9 = arith.constant dense<0.000000e+00> : vector<128xf32>
    %22 = vector.multi_reduction <add>, %21, %cst_9 [1] : vector<128x128xf32> to vector<128xf32>
    %23 = vector.shape_cast %22 : vector<128xf32> to vector<128x1xf32>
    %24 = tpu.reciprocal %23 {approx = true} : vector<128x1xf32> -> vector<128x1xf32>
    %25 = vector.broadcast %24 : vector<128x1xf32> to vector<128x128xf32>
    %26 = arith.mulf %21, %25 : vector<128x128xf32>
    %cst_10 = arith.constant dense<0.000000e+00> : vector<128xf32>
    %27 = vector.multi_reduction <add>, %26, %cst_10 [0] : vector<128x128xf32> to vector<128xf32>
    %28 = vector.shape_cast %27 : vector<128xf32> to vector<1x128xf32>
    %cst_11 = arith.constant 1.280000e+02 : f32
    %29 = vector.broadcast %cst_11 : f32 to vector<1x128xf32>
    %30 = arith.divf %28, %29 : vector<1x128xf32>
    %cst_12 = arith.constant dense<0.000000e+00> : vector<1x32xf32>
    %31 = tpu.matmul %30, %8, %cst_12 {dimension_numbers = #tpu.dot_dimension_numbers<[1], [0], [0], [1], [0, 0, 1, 1], [], []>} : vector<1x128xf32>, vector<128x32xf32>, vector<1x32xf32> -> vector<1x32xf32>
    %c0_13 = arith.constant 0 : index
    %c0_14 = arith.constant 0 : index
    %32 = vector.load %arg3[%c0_13, %c0_14] : memref<1x32xf32, #tpu.memory_space<vmem>>, vector<1x32xf32>
    tpu.vector_store %arg3[%c0_13, %c0_14], %31 {strides = array<i32>} : memref<1x32xf32, #tpu.memory_space<vmem>>, vector<1x32xf32>,
    return
  }
}

</mosaic_0001>

<llo_original>
// kernel: tpu_custom_call.1
$region0: #{tpu_custom_call.1}
  #allocation0 [shape = 'u32[]', space=smem, size = 0x4, offset = 0x4, fixed_abs, tag = 'smem constant byte address 0x4 - core index']
  #allocation1 [shape = 'u32[144,128]{1,0:T(1,128)}', space=vmem, size = 0x12000, scoped, tag = 'internal scratch']
  %s0 = inlined_call_operand.vmem [shape: f32[128,32], index: 0, kind: input, shape index: {}]
  %s1 = inlined_call_operand.vmem [shape: f32[32,96], index: 1, kind: input, shape index: {}]
  %s2 = inlined_call_operand.vmem [shape: f32[1,96], index: 2, kind: input, shape index: {}]
  %s3 = inlined_call_operand.hbm [shape: f32[1,32], index: 3, kind: output, shape index: {}]
  %s4 = sld [smem:[#allocation0]]
  $region22: #{tpu_custom_call.1} parent=0
    _
  %s6 = ssub.s32 1, %s4
  %s7 = scalar_select 0, %s6, %s4
  $region1: #{tpu_custom_call.1} parent=0
    #allocation2 [shape = 'u8[512]{0}', space=vmem, size = 0x400, scoped, tag = 'output window, operand 0, single buffered']
    #allocation3 [shape = 's32[1]{0}', space=sflag, size = 0x4, scoped, tag = 'scoped memory for tpu_custom_call.1']
    %8 = vsyncpa [#allocation3], 0
    // Predicated region
    $region2: #{tpu_custom_call.1} parent=1 // pred_check
      _
    $region3: #{tpu_custom_call.1} parent=1 // pred_check_branch
      %10 = sbr.rel (0) target = $region5
    $region4: #{tpu_custom_call.1} parent=1 // pred_region
      _
    $region5: #{tpu_custom_call.1} parent=1 // pred_fallthru
      _
    // Predicated region
    $region6: #{tpu_custom_call.1} parent=1 // pred_check
      _
    $region7: #{tpu_custom_call.1} parent=1 // pred_check_branch
      %12 = sbr.rel (0) target = $region9
    $region8: #{tpu_custom_call.1} parent=1 // pred_region
      _
    $region9: #{tpu_custom_call.1} parent=1 // pred_fallthru
      _
    // Predicated region
    $region10: #{tpu_custom_call.1} parent=1 // pred_check
      _
    $region11: #{tpu_custom_call.1} parent=1 // pred_check_branch
      %14 = sbr.rel (0) target = $region13
    $region12: #{tpu_custom_call.1} parent=1 // pred_region
      _
    $region13: #{tpu_custom_call.1} parent=1 // pred_fallthru
      _
    %v15 = vld [vmem:[%s0] sm:$0xff]
    %v16 = vld [vmem:[%s0 + $0x8] sm:$0xff]
    %v17 = vld [vmem:[%s0 + $0x10] sm:$0xff]
    %v18 = vld [vmem:[%s0 + $0x18] sm:$0xff]
    %v19 = vld [vmem:[%s0 + $0x20] sm:$0xff]
    %v20 = vld [vmem:[%s0 + $0x28] sm:$0xff]
    %v21 = vld [vmem:[%s0 + $0x30] sm:$0xff]
    %v22 = vld [vmem:[%s0 + $0x38] sm:$0xff]
    %v23 = vld [vmem:[%s0 + $0x40] sm:$0xff]
    %v24 = vld [vmem:[%s0 + $0x48] sm:$0xff]
    %v25 = vld [vmem:[%s0 + $0x50] sm:$0xff]
    %v26 = vld [vmem:[%s0 + $0x58] sm:$0xff]
    %v27 = vld [vmem:[%s0 + $0x60] sm:$0xff]
    %v28 = vld [vmem:[%s0 + $0x68] sm:$0xff]
    %v29 = vld [vmem:[%s0 + $0x70] sm:$0xff]
    %v30 = vld [vmem:[%s0 + $0x78] sm:$0xff]
    %v31 = vld [vmem:[%s1] sm:$0xff]
    %v32 = vld [vmem:[%s1 + $0x8] sm:$0xff]
    %v33 = vld [vmem:[%s1 + $0x10] sm:$0xff]
    %v34 = vld [vmem:[%s1 + $0x18] sm:$0xff]
    %v35 = vld [vmem:[%s2] sm:$0x1]
    %v37 = vlaneseq
    %v38 = vshrl.u32 %v37, 7
    %v39 = vsub.s32 0, %v38
    %v40 = vrot.slane %v35, %v39
    %vm42 = vcmask 261120
    %v44 = vsel %vm42, %v15, 0
    %v47 = vsel %vm42, %v16, 0
    %v50 = vsel %vm42, %v17, 0
    %v53 = vsel %vm42, %v18, 0
    %v56 = vsel %vm42, %v19, 0
    %v59 = vsel %vm42, %v20, 0
    %v62 = vsel %vm42, %v21, 0
    %v65 = vsel %vm42, %v22, 0
    %v68 = vsel %vm42, %v23, 0
    %v71 = vsel %vm42, %v24, 0
    %v74 = vsel %vm42, %v25, 0
    %v77 = vsel %vm42, %v26, 0
    %v80 = vsel %vm42, %v27, 0
    %v83 = vsel %vm42, %v28, 0
    %v86 = vsel %vm42, %v29, 0
    %v89 = vsel %vm42, %v30, 0
    %91 = vmatprep.subr.mxu0 0.0
    %92 = vmatpush1.msra.mxu0 %v31
    %93 = vmatprep.subr.mxu0 0.0
    %94 = vmatpush1.msra.mxu0 %v32
    %95 = vmatprep.subr.mxu0 0.0
    %96 = vmatpush1.msra.mxu0 %v33
    %97 = vmatprep.subr.mxu0 0.0
    %98 = vmatpush1.msra.mxu0 %v34
    %99 = vmatprep.subr.mxu0 0.0
    %100 = vmatpush1.msra.mxu0 0.0
    %101 = vmatprep.subr.mxu0 0.0
    %102 = vmatpush1.msra.mxu0 0.0
    %103 = vmatprep.subr.mxu0 0.0
    %104 = vmatpush1.msra.mxu0 0.0
    %105 = vmatprep.subr.mxu0 0.0
    %106 = vmatpush1.msra.mxu0 0.0
    %107 = vmatprep.subr.mxu0 0.0
    %108 = vmatpush1.msra.mxu0 0.0
    %109 = vmatprep.subr.mxu0 0.0
    %110 = vmatpush1.msra.mxu0 0.0
    %111 = vmatprep.subr.mxu0 0.0
    %112 = vmatpush1.msra.mxu0 0.0
    %113 = vmatprep.subr.mxu0 0.0
    %114 = vmatpush1.msra.mxu0 0.0
    %115 = vmatprep.subr.mxu0 0.0
    %116 = vmatpush1.msra.mxu0 0.0
    %117 = vmatprep.subr.mxu0 0.0
    %118 = vmatpush1.msra.mxu0 0.0
    %119 = vmatprep.subr.mxu0 0.0
    %120 = vmatpush1.msra.mxu0 0.0
    %121 = vmatprep.subr.mxu0 0.0
    %122 = vmatpush1.msra.mxu0 0.0
    %123 = vmatprep.subr.mxu0 0.0
    %124 = vmatpush1.msra.mxu0 0.0
    %125 = vmatprep.subr.mxu0 0.0
    %126 = vmatpush1.msra.mxu0 0.0
    %127 = vmatprep.subr.mxu0 0.0
    %128 = vmatpush1.msra.mxu0 0.0
    %129 = vmatprep.subr.mxu0 0.0
    %130 = vmatpush1.msra.mxu0 0.0
    %131 = vmatprep.subr.mxu0 0.0
    %132 = vmatpush1.msra.mxu0 0.0
    %133 = vmatprep.subr.mxu0 0.0
    %134 = vmatpush1.msra.mxu0 0.0
    %135 = vmatprep.subr.mxu0 0.0
    %136 = vmatpush1.msra.mxu0 0.0
    %137 = vmatprep.subr.mxu0 0.0
    %138 = vmatpush1.msra.mxu0 0.0
    %139 = vmatprep.subr.mxu0 0.0
    %140 = vmatpush1.msra.mxu0 0.0
    %141 = vmatprep.subr.mxu0 0.0
    %142 = vmatpush1.msra.mxu0 0.0
    %143 = vmatprep.subr.mxu0 0.0
    %144 = vmatpush1.msra.mxu0 0.0
    %145 = vmatprep.subr.mxu0 0.0
    %146 = vmatpush1.msra.mxu0 0.0
    %147 = vmatprep.subr.mxu0 0.0
    %148 = vmatpush1.msra.mxu0 0.0
    %149 = vmatprep.subr.mxu0 0.0
    %150 = vmatpush1.msra.mxu0 0.0
    %151 = vmatprep.subr.mxu0 0.0
    %152 = vmatpush1.msra.mxu0 0.0
    %153 = vmatprep.subr.mxu0 0.0
    %154 = vmatpush1.msra.mxu0 0.0
    %155 = vmatprep.mubr.f32.mxu0 0.0
    %156 = vmatmul.mubr.f32.gmra.mrb[0].mxu0 %v44
    %v157 = vpop.f32.mrb[0].mxu0
    %v158 = vadd.f32 %v40, %v157
    %v159 = vpop.f32.mrb[0].mxu0
    %160 = vmatprep.mubr.f32.mxu0 0.0
    %161 = vmatmul.mubr.f32.gmra.mrb[0].mxu0 %v47
    %v162 = vpop.f32.mrb[0].mxu0
    %v163 = vadd.f32 %v40, %v162
    %v164 = vpop.f32.mrb[0].mxu0
    %165 = vmatprep.mubr.f32.mxu0 0.0
    %166 = vmatmul.mubr.f32.gmra.mrb[0].mxu0 %v50
    %v167 = vpop.f32.mrb[0].mxu0
    %v168 = vadd.f32 %v40, %v167
    %v169 = vpop.f32.mrb[0].mxu0
    %170 = vmatprep.mubr.f32.mxu0 0.0
    %171 = vmatmul.mubr.f32.gmra.mrb[0].mxu0 %v53
    %v172 = vpop.f32.mrb[0].mxu0
    %v173 = vadd.f32 %v40, %v172
    %v174 = vpop.f32.mrb[0].mxu0
    %175 = vmatprep.mubr.f32.mxu0 0.0
    %176 = vmatmul.mubr.f32.gmra.mrb[0].mxu0 %v56
    %v177 = vpop.f32.mrb[0].mxu0
    %v178 = vadd.f32 %v40, %v177
    %v179 = vpop.f32.mrb[0].mxu0
    %180 = vmatprep.mubr.f32.mxu0 0.0
    %181 = vmatmul.mubr.f32.gmra.mrb[0].mxu0 %v59
    %v182 = vpop.f32.mrb[0].mxu0
    %v183 = vadd.f32 %v40, %v182
    %v184 = vpop.f32.mrb[0].mxu0
    %185 = vmatprep.mubr.f32.mxu0 0.0
    %186 = vmatmul.mubr.f32.gmra.mrb[0].mxu0 %v62
    %v187 = vpop.f32.mrb[0].mxu0
    %v188 = vadd.f32 %v40, %v187
    %v189 = vpop.f32.mrb[0].mxu0
    %190 = vmatprep.mubr.f32.mxu0 0.0
    %191 = vmatmul.mubr.f32.gmra.mrb[0].mxu0 %v65
    %v192 = vpop.f32.mrb[0].mxu0
    %v193 = vadd.f32 %v40, %v192
    %v194 = vpop.f32.mrb[0].mxu0
    %195 = vmatprep.mubr.f32.mxu0 0.0
    %196 = vmatmul.mubr.f32.gmra.mrb[0].mxu0 %v68
    %v197 = vpop.f32.mrb[0].mxu0
    %v198 = vadd.f32 %v40, %v197
    %v199 = vpop.f32.mrb[0].mxu0
    %200 = vmatprep.mubr.f32.mxu0 0.0
    %201 = vmatmul.mubr.f32.gmra.mrb[0].mxu0 %v71
    %v202 = vpop.f32.mrb[0].mxu0
    %v203 = vadd.f32 %v40, %v202
    %v204 = vpop.f32.mrb[0].mxu0
    %205 = vmatprep.mubr.f32.mxu0 0.0
    %206 = vmatmul.mubr.f32.gmra.mrb[0].mxu0 %v74
    %v207 = vpop.f32.mrb[0].mxu0
    %v208 = vadd.f32 %v40, %v207
    %v209 = vpop.f32.mrb[0].mxu0
    %210 = vmatprep.mubr.f32.mxu0 0.0
    %211 = vmatmul.mubr.f32.gmra.mrb[0].mxu0 %v77
    %v212 = vpop.f32.mrb[0].mxu0
    %v213 = vadd.f32 %v40, %v212
    %v214 = vpop.f32.mrb[0].mxu0
    %215 = vmatprep.mubr.f32.mxu0 0.0
    %216 = vmatmul.mubr.f32.gmra.mrb[0].mxu0 %v80
    %v217 = vpop.f32.mrb[0].mxu0
    %v218 = vadd.f32 %v40, %v217
    %v219 = vpop.f32.mrb[0].mxu0
    %220 = vmatprep.mubr.f32.mxu0 0.0
    %221 = vmatmul.mubr.f32.gmra.mrb[0].mxu0 %v83
    %v222 = vpop.f32.mrb[0].mxu0
    %v223 = vadd.f32 %v40, %v222
    %v224 = vpop.f32.mrb[0].mxu0
    %225 = vmatprep.mubr.f32.mxu0 0.0
    %226 = vmatmul.mubr.f32.gmra.mrb[0].mxu0 %v86
    %v227 = vpop.f32.mrb[0].mxu0
    %v228 = vadd.f32 %v40, %v227
    %v229 = vpop.f32.mrb[0].mxu0
    %230 = vmatprep.mubr.f32.mxu0 0.0
    %231 = vmatmul.mubr.f32.gmra.mrb[0].mxu0 %v89
    %v232 = vpop.f32.mrb[0].mxu0
    %v233 = vadd.f32 %v40, %v232
    %v234 = vpop.f32.mrb[0].mxu0
    %235 = vdwg.mxu0
    %252 = vrot.lane.b32.xlu0 %v158, 96
    %v253 = vpop.permute.xlu0 %252
    %254 = vrot.lane.b32.xlu0 %v163, 96
    %v255 = vpop.permute.xlu0 %254
    %256 = vrot.lane.b32.xlu0 %v168, 96
    %v257 = vpop.permute.xlu0 %256
    %258 = vrot.lane.b32.xlu0 %v173, 96
    %v259 = vpop.permute.xlu0 %258
    %260 = vrot.lane.b32.xlu0 %v178, 96
    %v261 = vpop.permute.xlu0 %260
    %262 = vrot.lane.b32.xlu0 %v183, 96
    %v263 = vpop.permute.xlu0 %262
    %264 = vrot.lane.b32.xlu0 %v188, 96
    %v265 = vpop.permute.xlu0 %264
    %266 = vrot.lane.b32.xlu0 %v193, 96
    %v267 = vpop.permute.xlu0 %266
    %268 = vrot.lane.b32.xlu0 %v198, 96
    %v269 = vpop.permute.xlu0 %268
    %270 = vrot.lane.b32.xlu0 %v203, 96
    %v271 = vpop.permute.xlu0 %270
    %272 = vrot.lane.b32.xlu0 %v208, 96
    %v273 = vpop.permute.xlu0 %272
    %274 = vrot.lane.b32.xlu0 %v213, 96
    %v275 = vpop.permute.xlu0 %274
    %276 = vrot.lane.b32.xlu0 %v218, 96
    %v277 = vpop.permute.xlu0 %276
    %278 = vrot.lane.b32.xlu0 %v223, 96
    %v279 = vpop.permute.xlu0 %278
    %280 = vrot.lane.b32.xlu0 %v228, 96
    %v281 = vpop.permute.xlu0 %280
    %282 = vrot.lane.b32.xlu0 %v233, 96
    %v283 = vpop.permute.xlu0 %282
    %v284 = vsel %vm42, %v158, 0
    %v286 = vsel %vm42, %v163, 0
    %v288 = vsel %vm42, %v168, 0
    %v290 = vsel %vm42, %v173, 0
    %v292 = vsel %vm42, %v178, 0
    %v294 = vsel %vm42, %v183, 0
    %v296 = vsel %vm42, %v188, 0
    %v298 = vsel %vm42, %v193, 0
    %v300 = vsel %vm42, %v198, 0
    %v302 = vsel %vm42, %v203, 0
    %v304 = vsel %vm42, %v208, 0
    %v306 = vsel %vm42, %v213, 0
    %v308 = vsel %vm42, %v218, 0
    %v310 = vsel %vm42, %v223, 0
    %v312 = vsel %vm42, %v228, 0
    %v314 = vsel %vm42, %v233, 0
    %v316 = vsel %vm42, %v253, 0
    %v318 = vsel %vm42, %v255, 0
    %v320 = vsel %vm42, %v257, 0
    %v322 = vsel %vm42, %v259, 0
    %v324 = vsel %vm42, %v261, 0
    %v326 = vsel %vm42, %v263, 0
    %v328 = vsel %vm42, %v265, 0
    %v330 = vsel %vm42, %v267, 0
    %v332 = vsel %vm42, %v269, 0
    %v334 = vsel %vm42, %v271, 0
    %v336 = vsel %vm42, %v273, 0
    %v338 = vsel %vm42, %v275, 0
    %v340 = vsel %vm42, %v277, 0
    %v342 = vsel %vm42, %v279, 0
    %v344 = vsel %vm42, %v281, 0
    %v346 = vsel %vm42, %v283, 0
    %348 = vmatprep.subr.mxu0 0.0
    %349 = vmatpush1.xpose.msra.mxu0 %v316
    %350 = vmatprep.subr.mxu0 0.0
    %351 = vmatpush1.xpose.msra.mxu0 %v318
    %352 = vmatprep.subr.mxu0 0.0
    %353 = vmatpush1.xpose.msra.mxu0 %v320
    %354 = vmatprep.subr.mxu0 0.0
    %355 = vmatpush1.xpose.msra.mxu0 %v322
    %356 = vmatprep.subr.mxu0 0.0
    %357 = vmatpush1.xpose.msra.mxu0 %v324
    %358 = vmatprep.subr.mxu0 0.0
    %359 = vmatpush1.xpose.msra.mxu0 %v326
    %360 = vmatprep.subr.mxu0 0.0
    %361 = vmatpush1.xpose.msra.mxu0 %v328
    %362 = vmatprep.subr.mxu0 0.0
    %363 = vmatpush1.xpose.msra.mxu0 %v330
    %364 = vmatprep.subr.mxu0 0.0
    %365 = vmatpush1.xpose.msra.mxu0 %v332
    %366 = vmatprep.subr.mxu0 0.0
    %367 = vmatpush1.xpose.msra.mxu0 %v334
    %368 = vmatprep.subr.mxu0 0.0
    %369 = vmatpush1.xpose.msra.mxu0 %v336
    %370 = vmatprep.subr.mxu0 0.0
    %371 = vmatpush1.xpose.msra.mxu0 %v338
    %372 = vmatprep.subr.mxu0 0.0
    %373 = vmatpush1.xpose.msra.mxu0 %v340
    %374 = vmatprep.subr.mxu0 0.0
    %375 = vmatpush1.xpose.msra.mxu0 %v342
    %376 = vmatprep.subr.mxu0 0.0
    %377 = vmatpush1.xpose.msra.mxu0 %v344
    %378 = vmatprep.subr.mxu0 0.0
    %379 = vmatpush1.xpose.msra.mxu0 %v346
    %380 = vmatprep.subr.mxu0 0.0
    %381 = vmatpush1.xpose.msra.mxu0 0.0
    %382 = vmatprep.subr.mxu0 0.0
    %383 = vmatpush1.xpose.msra.mxu0 0.0
    %384 = vmatprep.subr.mxu0 0.0
    %385 = vmatpush1.xpose.msra.mxu0 0.0
    %386 = vmatprep.subr.mxu0 0.0
    %387 = vmatpush1.xpose.msra.mxu0 0.0
    %388 = vmatprep.subr.mxu0 0.0
    %389 = vmatpush1.xpose.msra.mxu0 0.0
    %390 = vmatprep.subr.mxu0 0.0
    %391 = vmatpush1.xpose.msra.mxu0 0.0
    %392 = vmatprep.subr.mxu0 0.0
    %393 = vmatpush1.xpose.msra.mxu0 0.0
    %394 = vmatprep.subr.mxu0 0.0
    %395 = vmatpush1.xpose.msra.mxu0 0.0
    %396 = vmatprep.subr.mxu0 0.0
    %397 = vmatpush1.xpose.msra.mxu0 0.0
    %398 = vmatprep.subr.mxu0 0.0
    %399 = vmatpush1.xpose.msra.mxu0 0.0
    %400 = vmatprep.subr.mxu0 0.0
    %401 = vmatpush1.xpose.msra.mxu0 0.0
    %402 = vmatprep.subr.mxu0 0.0
    %403 = vmatpush1.xpose.msra.mxu0 0.0
    %404 = vmatprep.subr.mxu0 0.0
    %405 = vmatpush1.xpose.msra.mxu0 0.0
    %406 = vmatprep.subr.mxu0 0.0
    %407 = vmatpush1.xpose.msra.mxu0 0.0
    %408 = vmatprep.subr.mxu0 0.0
    %409 = vmatpush1.xpose.msra.mxu0 0.0
    %410 = vmatprep.subr.mxu0 0.0
    %411 = vmatpush1.xpose.msra.mxu0 0.0
    %412 = vmatprep.mubr.f32.mxu0 0.0
    %413 = vmatmul.mubr.f32.gmra.mrb[0].mxu0 %v284
    %v414 = vpop.f32.mrb[0].mxu0
    %v415 = vadd.f32 0.0, %v414
    %v416 = vpop.f32.mrb[0].mxu0
    %417 = vmatprep.mubr.f32.mxu0 0.0
    %418 = vmatmul.mubr.f32.gmra.mrb[0].mxu0 %v286
    %v419 = vpop.f32.mrb[0].mxu0
    %v420 = vadd.f32 0.0, %v419
    %v421 = vpop.f32.mrb[0].mxu0
    %422 = vmatprep.mubr.f32.mxu0 0.0
    %423 = vmatmul.mubr.f32.gmra.mrb[0].mxu0 %v288
    %v424 = vpop.f32.mrb[0].mxu0
    %v425 = vadd.f32 0.0, %v424
    %v426 = vpop.f32.mrb[0].mxu0
    %427 = vmatprep.mubr.f32.mxu0 0.0
    %428 = vmatmul.mubr.f32.gmra.mrb[0].mxu0 %v290
    %v429 = vpop.f32.mrb[0].mxu0
    %v430 = vadd.f32 0.0, %v429
    %v431 = vpop.f32.mrb[0].mxu0
    %432 = vmatprep.mubr.f32.mxu0 0.0
    %433 = vmatmul.mubr.f32.gmra.mrb[0].mxu0 %v292
    %v434 = vpop.f32.mrb[0].mxu0
    %v435 = vadd.f32 0.0, %v434
    %v436 = vpop.f32.mrb[0].mxu0
    %437 = vmatprep.mubr.f32.mxu0 0.0
    %438 = vmatmul.mubr.f32.gmra.mrb[0].mxu0 %v294
    %v439 = vpop.f32.mrb[0].mxu0
    %v440 = vadd.f32 0.0, %v439
    %v441 = vpop.f32.mrb[0].mxu0
    %442 = vmatprep.mubr.f32.mxu0 0.0
    %443 = vmatmul.mubr.f32.gmra.mrb[0].mxu0 %v296
    %v444 = vpop.f32.mrb[0].mxu0
    %v445 = vadd.f32 0.0, %v444
    %v446 = vpop.f32.mrb[0].mxu0
    %447 = vmatprep.mubr.f32.mxu0 0.0
    %448 = vmatmul.mubr.f32.gmra.mrb[0].mxu0 %v298
    %v449 = vpop.f32.mrb[0].mxu0
    %v450 = vadd.f32 0.0, %v449
    %v451 = vpop.f32.mrb[0].mxu0
    %452 = vmatprep.mubr.f32.mxu0 0.0
    %453 = vmatmul.mubr.f32.gmra.mrb[0].mxu0 %v300
    %v454 = vpop.f32.mrb[0].mxu0
    %v455 = vadd.f32 0.0, %v454
    %v456 = vpop.f32.mrb[0].mxu0
    %457 = vmatprep.mubr.f32.mxu0 0.0
    %458 = vmatmul.mubr.f32.gmra.mrb[0].mxu0 %v302
    %v459 = vpop.f32.mrb[0].mxu0
    %v460 = vadd.f32 0.0, %v459
    %v461 = vpop.f32.mrb[0].mxu0
    %462 = vmatprep.mubr.f32.mxu0 0.0
    %463 = vmatmul.mubr.f32.gmra.mrb[0].mxu0 %v304
    %v464 = vpop.f32.mrb[0].mxu0
    %v465 = vadd.f32 0.0, %v464
    %v466 = vpop.f32.mrb[0].mxu0
    %467 = vmatprep.mubr.f32.mxu0 0.0
    %468 = vmatmul.mubr.f32.gmra.mrb[0].mxu0 %v306
    %v469 = vpop.f32.mrb[0].mxu0
    %v470 = vadd.f32 0.0, %v469
    %v471 = vpop.f32.mrb[0].mxu0
    %472 = vmatprep.mubr.f32.mxu0 0.0
    %473 = vmatmul.mubr.f32.gmra.mrb[0].mxu0 %v308
    %v474 = vpop.f32.mrb[0].mxu0
    %v475 = vadd.f32 0.0, %v474
    %v476 = vpop.f32.mrb[0].mxu0
    %477 = vmatprep.mubr.f32.mxu0 0.0
    %478 = vmatmul.mubr.f32.gmra.mrb[0].mxu0 %v310
    %v479 = vpop.f32.mrb[0].mxu0
    %v480 = vadd.f32 0.0, %v479
    %v481 = vpop.f32.mrb[0].mxu0
    %482 = vmatprep.mubr.f32.mxu0 0.0
    %483 = vmatmul.mubr.f32.gmra.mrb[0].mxu0 %v312
    %v484 = vpop.f32.mrb[0].mxu0
    %v485 = vadd.f32 0.0, %v484
    %v486 = vpop.f32.mrb[0].mxu0
    %487 = vmatprep.mubr.f32.mxu0 0.0
    %488 = vmatmul.mubr.f32.gmra.mrb[0].mxu0 %v314
    %v489 = vpop.f32.mrb[0].mxu0
    %v490 = vadd.f32 0.0, %v489
    %v491 = vpop.f32.mrb[0].mxu0
    %492 = vdwg.mxu0
    %v493 = vmax.f32 %v415, %v435
    %v494 = vmax.f32 %v420, %v440
    %v495 = vmax.f32 %v425, %v445
    %v496 = vmax.f32 %v430, %v450
    %v497 = vmax.f32 %v493, %v455
    %v498 = vmax.f32 %v494, %v460
    %v499 = vmax.f32 %v495, %v465
    %v500 = vmax.f32 %v496, %v470
    %v501 = vmax.f32 %v497, %v475
    %v502 = vmax.f32 %v498, %v480
    %v503 = vmax.f32 %v499, %v485
    %v504 = vmax.f32 %v500, %v490
    %v505 = vmax.f32 %v501, %v502
    %v506 = vmax.f32 %v503, %v504
    %v507 = vmax.f32 %v505, %v506
    %508 = vmax.xlane.f32.xlu0 %v507
    %v509 = vpop.xlane.xlu0 %508
    %v510 = vrot.slane %v509, 4
    %v511 = vmax.f32 %v509, %v510
    %v512 = vrot.slane %v511, 2
    %v513 = vmax.f32 %v511, %v512
    %v514 = vrot.slane %v513, 1
    %v515 = vmax.f32 %v513, %v514
    %s516 = vtos %v515
    %v517 = vstv %s516
    %v518 = vrcp.pop %v517
    %s519 = vtos %v518
    %v520 = vstv %s519
    %v521 = vmul.f32 %v415, %v520
    %v522 = vmul.f32 %v420, %v520
    %v523 = vmul.f32 %v425, %v520
    %v524 = vmul.f32 %v430, %v520
    %v525 = vmul.f32 %v435, %v520
    %v526 = vmul.f32 %v440, %v520
    %v527 = vmul.f32 %v445, %v520
    %v528 = vmul.f32 %v450, %v520
    %v529 = vmul.f32 %v455, %v520
    %v530 = vmul.f32 %v460, %v520
    %v531 = vmul.f32 %v465, %v520
    %v532 = vmul.f32 %v470, %v520
    %v533 = vmul.f32 %v475, %v520
    %v534 = vmul.f32 %v480, %v520
    %v535 = vmul.f32 %v485, %v520
    %v536 = vmul.f32 %v490, %v520
    %537 = vmax.xlane.f32.xlu0 %v521
    %v538 = vpop.xlane.xlu0 %537
    %539 = vmax.xlane.f32.xlu0 %v522
    %v540 = vpop.xlane.xlu0 %539
    %541 = vmax.xlane.f32.xlu0 %v523
    %v542 = vpop.xlane.xlu0 %541
    %543 = vmax.xlane.f32.xlu0 %v524
    %v544 = vpop.xlane.xlu0 %543
    %545 = vmax.xlane.f32.xlu0 %v525
    %v546 = vpop.xlane.xlu0 %545
    %547 = vmax.xlane.f32.xlu0 %v526
    %v548 = vpop.xlane.xlu0 %547
    %549 = vmax.xlane.f32.xlu0 %v527
    %v550 = vpop.xlane.xlu0 %549
    %551 = vmax.xlane.f32.xlu0 %v528
    %v552 = vpop.xlane.xlu0 %551
    %553 = vmax.xlane.f32.xlu0 %v529
    %v554 = vpop.xlane.xlu0 %553
    %555 = vmax.xlane.f32.xlu0 %v530
    %v556 = vpop.xlane.xlu0 %555
    %557 = vmax.xlane.f32.xlu0 %v531
    %v558 = vpop.xlane.xlu0 %557
    %559 = vmax.xlane.f32.xlu0 %v532
    %v560 = vpop.xlane.xlu0 %559
    %561 = vmax.xlane.f32.xlu0 %v533
    %v562 = vpop.xlane.xlu0 %561
    %563 = vmax.xlane.f32.xlu0 %v534
    %v564 = vpop.xlane.xlu0 %563
    %565 = vmax.xlane.f32.xlu0 %v535
    %v566 = vpop.xlane.xlu0 %565
    %567 = vmax.xlane.f32.xlu0 %v536
    %v568 = vpop.xlane.xlu0 %567
    %v569 = vsub.f32 %v521, %v538
    %v570 = vsub.f32 %v522, %v540
    %v571 = vsub.f32 %v523, %v542
    %v572 = vsub.f32 %v524, %v544
    %v573 = vsub.f32 %v525, %v546
    %v574 = vsub.f32 %v526, %v548
    %v575 = vsub.f32 %v527, %v550
    %v576 = vsub.f32 %v528, %v552
    %v577 = vsub.f32 %v529, %v554
    %v578 = vsub.f32 %v530, %v556
    %v579 = vsub.f32 %v531, %v558
    %v580 = vsub.f32 %v532, %v560
    %v581 = vsub.f32 %v533, %v562
    %v582 = vsub.f32 %v534, %v564
    %v583 = vsub.f32 %v535, %v566
    %v584 = vsub.f32 %v536, %v568
    %v585 = vmul.f32 %v569, 1.442695
    %v586 = vpow.pop %v585
    %v587 = vmul.f32 %v570, 1.442695
    %v588 = vpow.pop %v587
    %v589 = vmul.f32 %v571, 1.442695
    %v590 = vpow.pop %v589
    %v591 = vmul.f32 %v572, 1.442695
    %v592 = vpow.pop %v591
    %v593 = vmul.f32 %v573, 1.442695
    %v594 = vpow.pop %v593
    %v595 = vmul.f32 %v574, 1.442695
    %v596 = vpow.pop %v595
    %v597 = vmul.f32 %v575, 1.442695
    %v598 = vpow.pop %v597
    %v599 = vmul.f32 %v576, 1.442695
    %v600 = vpow.pop %v599
    %v601 = vmul.f32 %v577, 1.442695
    %v602 = vpow.pop %v601
    %v603 = vmul.f32 %v578, 1.442695
    %v604 = vpow.pop %v603
    %v605 = vmul.f32 %v579, 1.442695
    %v606 = vpow.pop %v605
    %v607 = vmul.f32 %v580, 1.442695
    %v608 = vpow.pop %v607
    %v609 = vmul.f32 %v581, 1.442695
    %v610 = vpow.pop %v609
    %v611 = vmul.f32 %v582, 1.442695
    %v612 = vpow.pop %v611
    %v613 = vmul.f32 %v583, 1.442695
    %v614 = vpow.pop %v613
    %v615 = vmul.f32 %v584, 1.442695
    %v616 = vpow.pop %v615
    %617 = vadd.xlane.f32.xlu0 %v586
    %v618 = vpop.xlane.xlu0 %617
    %619 = vadd.xlane.f32.xlu0 %v588
    %v620 = vpop.xlane.xlu0 %619
    %621 = vadd.xlane.f32.xlu0 %v590
    %v622 = vpop.xlane.xlu0 %621
    %623 = vadd.xlane.f32.xlu0 %v592
    %v624 = vpop.xlane.xlu0 %623
    %625 = vadd.xlane.f32.xlu0 %v594
    %v626 = vpop.xlane.xlu0 %625
    %627 = vadd.xlane.f32.xlu0 %v596
    %v628 = vpop.xlane.xlu0 %627
    %629 = vadd.xlane.f32.xlu0 %v598
    %v630 = vpop.xlane.xlu0 %629
    %631 = vadd.xlane.f32.xlu0 %v600
    %v632 = vpop.xlane.xlu0 %631
    %633 = vadd.xlane.f32.xlu0 %v602
    %v634 = vpop.xlane.xlu0 %633
    %635 = vadd.xlane.f32.xlu0 %v604
    %v636 = vpop.xlane.xlu0 %635
    %637 = vadd.xlane.f32.xlu0 %v606
    %v638 = vpop.xlane.xlu0 %637
    %639 = vadd.xlane.f32.xlu0 %v608
    %v640 = vpop.xlane.xlu0 %639
    %641 = vadd.xlane.f32.xlu0 %v610
    %v642 = vpop.xlane.xlu0 %641
    %643 = vadd.xlane.f32.xlu0 %v612
    %v644 = vpop.xlane.xlu0 %643
    %645 = vadd.xlane.f32.xlu0 %v614
    %v646 = vpop.xlane.xlu0 %645
    %647 = vadd.xlane.f32.xlu0 %v616
    %v648 = vpop.xlane.xlu0 %647
    %v649 = vrcp.pop %v618
    %v650 = vrcp.pop %v620
    %v651 = vrcp.pop %v622
    %v652 = vrcp.pop %v624
    %v653 = vrcp.pop %v626
    %v654 = vrcp.pop %v628
    %v655 = vrcp.pop %v630
    %v656 = vrcp.pop %v632
    %v657 = vrcp.pop %v634
    %v658 = vrcp.pop %v636
    %v659 = vrcp.pop %v638
    %v660 = vrcp.pop %v640
    %v661 = vrcp.pop %v642
    %v662 = vrcp.pop %v644
    %v663 = vrcp.pop %v646
    %v664 = vrcp.pop %v648
    %v665 = vmul.f32 %v586, %v649
    %v666 = vmul.f32 %v588, %v650
    %v667 = vmul.f32 %v590, %v651
    %v668 = vmul.f32 %v592, %v652
    %v669 = vmul.f32 %v594, %v653
    %v670 = vmul.f32 %v596, %v654
    %v671 = vmul.f32 %v598, %v655
    %v672 = vmul.f32 %v600, %v656
    %v673 = vmul.f32 %v602, %v657
    %v674 = vmul.f32 %v604, %v658
    %v675 = vmul.f32 %v606, %v659
    %v676 = vmul.f32 %v608, %v660
    %v677 = vmul.f32 %v610, %v661
    %v678 = vmul.f32 %v612, %v662
    %v679 = vmul.f32 %v614, %v663
    %v680 = vmul.f32 %v616, %v664
    %v681 = vadd.f32 %v665, %v666
    %v682 = vadd.f32 %v681, %v667
    %v683 = vadd.f32 %v682, %v668
    %v684 = vadd.f32 %v683, %v669
    %v685 = vadd.f32 %v684, %v670
    %v686 = vadd.f32 %v685, %v671
    %v687 = vadd.f32 %v686, %v672
    %v688 = vadd.f32 %v687, %v673
    %v689 = vadd.f32 %v688, %v674
    %v690 = vadd.f32 %v689, %v675
    %v691 = vadd.f32 %v690, %v676
    %v692 = vadd.f32 %v691, %v677
    %v693 = vadd.f32 %v692, %v678
    %v694 = vadd.f32 %v693, %v679
    %v695 = vadd.f32 %v694, %v680
    %v696 = vrot.slane %v695, 4
    %v697 = vadd.f32 %v695, %v696
    %v698 = vrot.slane %v697, 2
    %v699 = vadd.f32 %v697, %v698
    %v700 = vrot.slane %v699, 1
    %v701 = vadd.f32 %v699, %v700
    %v702 = vrcp.pop 128.0
    %v703 = vmul.f32 %v701, %v702
    %704 = vrot.lane.b32.xlu0 %v158, 64
    %v705 = vpop.permute.xlu0 %704
    %706 = vrot.lane.b32.xlu0 %v163, 64
    %v707 = vpop.permute.xlu0 %706
    %708 = vrot.lane.b32.xlu0 %v168, 64
    %v709 = vpop.permute.xlu0 %708
    %710 = vrot.lane.b32.xlu0 %v173, 64
    %v711 = vpop.permute.xlu0 %710
    %712 = vrot.lane.b32.xlu0 %v178, 64
    %v713 = vpop.permute.xlu0 %712
    %714 = vrot.lane.b32.xlu0 %v183, 64
    %v715 = vpop.permute.xlu0 %714
    %716 = vrot.lane.b32.xlu0 %v188, 64
    %v717 = vpop.permute.xlu0 %716
    %718 = vrot.lane.b32.xlu0 %v193, 64
    %v719 = vpop.permute.xlu0 %718
    %720 = vrot.lane.b32.xlu0 %v198, 64
    %v721 = vpop.permute.xlu0 %720
    %722 = vrot.lane.b32.xlu0 %v203, 64
    %v723 = vpop.permute.xlu0 %722
    %724 = vrot.lane.b32.xlu0 %v208, 64
    %v725 = vpop.permute.xlu0 %724
    %726 = vrot.lane.b32.xlu0 %v213, 64
    %v727 = vpop.permute.xlu0 %726
    %728 = vrot.lane.b32.xlu0 %v218, 64
    %v729 = vpop.permute.xlu0 %728
    %730 = vrot.lane.b32.xlu0 %v223, 64
    %v731 = vpop.permute.xlu0 %730
    %732 = vrot.lane.b32.xlu0 %v228, 64
    %v733 = vpop.permute.xlu0 %732
    %734 = vrot.lane.b32.xlu0 %v233, 64
    %v735 = vpop.permute.xlu0 %734
    %752 = vmatprep.subr.mxu0 0.0
    %753 = vmatpush1.msra.mxu0 %v705
    %754 = vmatprep.subr.mxu0 0.0
    %755 = vmatpush1.msra.mxu0 %v707
    %756 = vmatprep.subr.mxu0 0.0
    %757 = vmatpush1.msra.mxu0 %v709
    %758 = vmatprep.subr.mxu0 0.0
    %759 = vmatpush1.msra.mxu0 %v711
    %760 = vmatprep.subr.mxu0 0.0
    %761 = vmatpush1.msra.mxu0 %v713
    %762 = vmatprep.subr.mxu0 0.0
    %763 = vmatpush1.msra.mxu0 %v715
    %764 = vmatprep.subr.mxu0 0.0
    %765 = vmatpush1.msra.mxu0 %v717
    %766 = vmatprep.subr.mxu0 0.0
    %767 = vmatpush1.msra.mxu0 %v719
    %768 = vmatprep.subr.mxu0 0.0
    %769 = vmatpush1.msra.mxu0 %v721
    %770 = vmatprep.subr.mxu0 0.0
    %771 = vmatpush1.msra.mxu0 %v723
    %772 = vmatprep.subr.mxu0 0.0
    %773 = vmatpush1.msra.mxu0 %v725
    %774 = vmatprep.subr.mxu0 0.0
    %775 = vmatpush1.msra.mxu0 %v727
    %776 = vmatprep.subr.mxu0 0.0
    %777 = vmatpush1.msra.mxu0 %v729
    %778 = vmatprep.subr.mxu0 0.0
    %779 = vmatpush1.msra.mxu0 %v731
    %780 = vmatprep.subr.mxu0 0.0
    %781 = vmatpush1.msra.mxu0 %v733
    %782 = vmatprep.subr.mxu0 0.0
    %783 = vmatpush1.msra.mxu0 %v735
    %784 = vmatprep.subr.mxu0 0.0
    %785 = vmatpush1.msra.mxu0 0.0
    %786 = vmatprep.subr.mxu0 0.0
    %787 = vmatpush1.msra.mxu0 0.0
    %788 = vmatprep.subr.mxu0 0.0
    %789 = vmatpush1.msra.mxu0 0.0
    %790 = vmatprep.subr.mxu0 0.0
    %791 = vmatpush1.msra.mxu0 0.0
    %792 = vmatprep.subr.mxu0 0.0
    %793 = vmatpush1.msra.mxu0 0.0
    %794 = vmatprep.subr.mxu0 0.0
    %795 = vmatpush1.msra.mxu0 0.0
    %796 = vmatprep.subr.mxu0 0.0
    %797 = vmatpush1.msra.mxu0 0.0
    %798 = vmatprep.subr.mxu0 0.0
    %799 = vmatpush1.msra.mxu0 0.0
    %800 = vmatprep.subr.mxu0 0.0
    %801 = vmatpush1.msra.mxu0 0.0
    %802 = vmatprep.subr.mxu0 0.0
    %803 = vmatpush1.msra.mxu0 0.0
    %804 = vmatprep.subr.mxu0 0.0
    %805 = vmatpush1.msra.mxu0 0.0
    %806 = vmatprep.subr.mxu0 0.0
    %807 = vmatpush1.msra.mxu0 0.0
    %808 = vmatprep.subr.mxu0 0.0
    %809 = vmatpush1.msra.mxu0 0.0
    %810 = vmatprep.subr.mxu0 0.0
    %811 = vmatpush1.msra.mxu0 0.0
    %812 = vmatprep.subr.mxu0 0.0
    %813 = vmatpush1.msra.mxu0 0.0
    %814 = vmatprep.subr.mxu0 0.0
    %815 = vmatpush1.msra.mxu0 0.0
    %816 = vmatprep.mubr.f32.mxu0 0.0
    %817 = vmatmul.mubr.f32.gmra.mrb[0].mxu0 %v703
    %v818 = vpop.f32.mrb[0].mxu0
    %v819 = vadd.f32 0.0, %v818
    %v820 = vpop.f32.mrb[0].mxu0
    %821 = vdwg.mxu0
    %vm822 = vcmask 253952
    %823 = vst.msk [vmem:[#allocation2] sm:$0x1] %vm822, %v819
    // Predicated region
    $region14: #{tpu_custom_call.1} parent=1 // pred_check
      _
    $region15: #{tpu_custom_call.1} parent=1 // pred_check_branch
      %825 = sbr.rel (0) target = $region17
    $region16: #{tpu_custom_call.1} parent=1 // pred_region
      %s827 = ssub.s32 16, 16
      %828 = vsyncadd [#allocation3], %s827
      %s830 = sshll.u32 [#allocation2], 4
      %s831 = int_to_ptr.vmem [resolvable:$true] %s830
      %833 = dma.vmem_to_hbm [thread:$0]  %s831, 16, %s3, [#allocation3]
    $region17: #{tpu_custom_call.1} parent=1 // pred_fallthru
      _
    // Predicated region
    $region18: #{tpu_custom_call.1} parent=1 // pred_check
      _
    $region19: #{tpu_custom_call.1} parent=1 // pred_check_branch
      %835 = sbr.rel (0) target = $region21
    $region20: #{tpu_custom_call.1} parent=1 // pred_region
      %836 = dma.done [#allocation3], 16
    $region21: #{tpu_custom_call.1} parent=1 // pred_fallthru
      _
    %837 = vsyncpa [#allocation3], 1

</llo_original>
